<compile_context>
chip_gen: v5e
topology: v5e:2x2
jax: 0.10.0
libtpu: 0.0.40
codegen_flags: <defaults>
</compile_context>

<pallas_src>
import functools

import jax
import jax.numpy as jnp
from jax import lax
from jax.experimental import pallas as pl
from jax.experimental.pallas import tpu as pltpu


def _focal_loss_kernel(x_ref, t_ref, alpha_ref, out_ref, acc_ref,
                       *, gamma, num_pixels, total, size_average, apply_alpha):
    """One grid step processes a (1, C, T) logits tile (T pixels on lanes).

    x_ref:     (1, C, T)  logits tile (original dtype, upcast in-kernel)
    t_ref:     (1, 1, T)  int32 target class per pixel
    alpha_ref: (C, 1)     float32 per-class alpha weights
    out_ref:   (1, 1)     float32 scalar result (same block across the grid)
    acc_ref:   (1, T)     float32 VMEM vector accumulator scratch
    """
    n = pl.program_id(0)
    p = pl.program_id(1)
    num_n = pl.num_programs(0)
    num_p = pl.num_programs(1)

    @pl.when(jnp.logical_and(n == 0, p == 0))
    def _():
        acc_ref[...] = jnp.zeros_like(acc_ref)

    x = x_ref[0].astype(jnp.float32)            # (C, T)  pixels on lanes
    t = t_ref[0]                                # (1, T)  int32
    C, T = x.shape

    # Tail masking (static decision): only if the lane tile does not divide
    # the per-image pixel count.
    needs_mask = (num_pixels % T) != 0
    if needs_mask:
        lane = lax.broadcasted_iota(jnp.int32, (1, T), 1)
        valid = (p * T + lane) < num_pixels     # (1, T) bool
        x = jnp.where(valid, x, 0.0)            # keep padded lanes finite

    # Numerically stable log_softmax over the (small) class axis = sublanes.
    m = jnp.max(x, axis=0, keepdims=True)                       # (1, T)
    shifted = x - m                                             # (C, T)
    lse = jnp.log(jnp.sum(jnp.exp(shifted), axis=0, keepdims=True))
    logp = shifted - lse                                        # (C, T)

    # Gather logp at the target class via a one-hot compare (no dynamic gather).
    cls = lax.broadcasted_iota(jnp.int32, (C, T), 0)
    onehot = (cls == t).astype(jnp.float32)                     # (C, T)
    logpt = jnp.sum(logp * onehot, axis=0, keepdims=True)       # (1, T)

    pt = jnp.exp(logpt)                         # computed before alpha scaling

    if apply_alpha:
        at = jnp.sum(alpha_ref[...] * onehot, axis=0, keepdims=True)  # (1, T)
        logpt = logpt * at

    # gamma is a static Python float -> compile-time specialization.
    if gamma == 0.0:
        loss = -logpt
    else:
        one_minus_pt = 1.0 - pt
        gi = int(gamma)
        if float(gi) == float(gamma) and 1 <= gi <= 4:
            factor = one_minus_pt
            for _ in range(gi - 1):
                factor = factor * one_minus_pt   # VPU multiplies, no pow/EUP
        else:
            factor = one_minus_pt ** jnp.float32(gamma)
        loss = -factor * logpt                   # (1, T)

    if needs_mask:
        loss = jnp.where(valid, loss, 0.0)

    # Vector accumulate (VPU add); single cross-lane reduce only at the end.
    acc_ref[...] += loss

    @pl.when(jnp.logical_and(n == num_n - 1, p == num_p - 1))
    def _():
        s = jnp.sum(acc_ref[...], keepdims=True)        # (1, 1)
        if size_average:
            s = s / jnp.float32(total)
        out_ref[...] = s


def focal_loss_pallas(logits, target, *, gamma=0.0, alpha=None,
                      size_average=True, lane_tile=8192):
    """JAX/Pallas equivalent of FocalLoss.forward(input, target).

    logits: [N, C, H, W] (or [N, C, L], or [R, C]) float logits
    target: matching integer class indices in [0, C)
    """
    if logits.ndim > 2:
        N, C = logits.shape[0], logits.shape[1]
        x = logits.reshape(N, C, -1)                       # free reshape, no transpose
        t = target.reshape(N, 1, -1).astype(jnp.int32)
    else:
        R, C = logits.shape
        x = logits.T.reshape(1, C, R)                      # 2-D fallback
        t = target.reshape(1, 1, R).astype(jnp.int32)
        N = 1

    P = x.shape[2]                 # pixels per image
    total = N * P                  # total rows for the mean

    # Lane tile: multiple of 128 (or the full pixel extent if not aligned).
    if P % 128 == 0:
        T = min(max(128, (lane_tile // 128) * 128), P)
    else:
        T = P
    num_p = pl.cdiv(P, T)

    # Alpha handling mirrors the module __init__.
    if alpha is None:
        alpha_vec = jnp.ones((C, 1), jnp.float32)
        apply_alpha = False
    elif isinstance(alpha, (float, int)):
        assert C == 2, "scalar alpha implies binary classification"
        alpha_vec = jnp.array([alpha, 1.0 - alpha], jnp.float32).reshape(C, 1)
        apply_alpha = True
    else:
        alpha_vec = jnp.asarray(alpha, jnp.float32).reshape(C, 1)
        apply_alpha = True

    kernel = functools.partial(
        _focal_loss_kernel, gamma=float(gamma), num_pixels=P, total=total,
        size_average=size_average, apply_alpha=apply_alpha)

    out = pl.pallas_call(
        kernel,
        out_shape=jax.ShapeDtypeStruct((1, 1), jnp.float32),
        grid_spec=pltpu.PrefetchScalarGridSpec(
            num_scalar_prefetch=0,
            grid=(N, num_p),
            in_specs=[
                pl.BlockSpec((1, C, T), lambda n, p: (n, 0, p)),   # logits tile
                pl.BlockSpec((1, 1, T), lambda n, p: (n, 0, p)),   # targets tile
                pl.BlockSpec((C, 1), lambda n, p: (0, 0)),         # alpha (resident)
            ],
            out_specs=pl.BlockSpec((1, 1), lambda n, p: (0, 0)),   # scalar accum
            scratch_shapes=[pltpu.VMEM((1, T), jnp.float32)],
        ),
        compiler_params=pltpu.CompilerParams(
            dimension_semantics=("arbitrary", "arbitrary")),       # reduction grid
    )(x, t, alpha_vec)

    return out[0, 0]


def _focal_loss_ref(logits_nchw, target_nhw, *, gamma, alpha, size_average):
    """Pure-JAX reference for correctness checking."""
    N, C, H, W = logits_nchw.shape
    x = (logits_nchw.reshape(N, C, H * W).transpose(0, 2, 1)
         .reshape(-1, C)).astype(jnp.float32)
    t = target_nhw.reshape(-1).astype(jnp.int32)
    logp = jax.nn.log_softmax(x, axis=-1)
    logpt = jnp.take_along_axis(logp, t[:, None], axis=1)[:, 0]
    pt = jnp.exp(logpt)
    if alpha is not None:
        a = jnp.asarray(alpha, jnp.float32)
        logpt = logpt * a[t]
    loss = -1.0 * (1.0 - pt) ** gamma * logpt
    return loss.mean() if size_average else loss.sum()


if __name__ == "__main__":
    key = jax.random.PRNGKey(0)
    k1, k2 = jax.random.split(key)

    N, C, H, W = 2, 4, 16, 16
    logits = jax.random.normal(k1, (N, C, H, W), jnp.float32)
    target = jax.random.randint(k2, (N, H, W), 0, C, jnp.int32)

    gamma = 2.0
    alpha = [0.1, 0.2, 0.3, 0.4]

    loss = focal_loss_pallas(logits, target, gamma=gamma, alpha=alpha,
                             size_average=True)
    loss = jax.block_until_ready(loss)

    ref = _focal_loss_ref(logits, target, gamma=gamma, alpha=alpha,
                          size_average=True)
    assert jnp.allclose(loss, ref, rtol=1e-5, atol=1e-6), (loss, ref)

    # Also exercise the no-alpha / gamma=0 path (pure CE mean) on the kernel.
    loss2 = jax.block_until_ready(
        focal_loss_pallas(logits, target, gamma=0.0, alpha=None,
                          size_average=True))
    ref2 = _focal_loss_ref(logits, target, gamma=0.0, alpha=None,
                           size_average=True)
    assert jnp.allclose(loss2, ref2, rtol=1e-5, atol=1e-6), (loss2, ref2)

    print("KERNEL_OK")
</pallas_src>

<mosaic_0001>
module attributes {stable_mosaic.version = 11 : i64} {
  func.func @_focal_loss_kernel(%arg0: i32, %arg1: i32, %arg2: memref<1x4x256xf32, #tpu.memory_space<vmem>>, %arg3: memref<1x1x256xi32, #tpu.memory_space<vmem>>, %arg4: memref<4x1xf32, #tpu.memory_space<vmem>>, %arg5: memref<1x1xf32, #tpu.memory_space<vmem>>, %arg6: memref<1x256xf32, #tpu.memory_space<vmem>>) attributes {dimension_semantics = [#tpu.dimension_semantics<arbitrary>, #tpu.dimension_semantics<arbitrary>], iteration_bounds = array<i64: 2, 1>, scalar_prefetch = 0 : i64, scratch_operands = 1 : i64, tpu.core_type = #tpu.core_type<tc>, window_params = [{transform_indices = @transform_0, window_bounds = array<i64: 1, 4, 256>}, {transform_indices = @transform_1, window_bounds = array<i64: 1, 1, 256>}, {pipeline_mode = #tpu.pipeline_mode<synchronous>, transform_indices = @transform_2, window_bounds = array<i64: 4, 1>}, {pipeline_mode = #tpu.pipeline_mode<synchronous>, transform_indices = @transform_3, window_bounds = array<i64: 1, 1>}]} {
    %c0_i32 = arith.constant 0 : i32
    %0 = arith.cmpi eq, %arg0, %c0_i32 : i32
    %c0_i32_0 = arith.constant 0 : i32
    %1 = arith.cmpi eq, %arg1, %c0_i32_0 : i32
    %2 = arith.andi %0, %1 : i1
    %3 = arith.extui %2 : i1 to i32
    %c0_i32_1 = arith.constant 0 : i32
    %4 = arith.cmpi ne, %3, %c0_i32_1 : i32
    scf.if %4 {
      %cst_20 = arith.constant 0.000000e+00 : f32
      %48 = vector.broadcast %cst_20 : f32 to vector<1x256xf32>
      %c0_21 = arith.constant 0 : index
      %c0_22 = arith.constant 0 : index
      %49 = vector.load %arg6[%c0_21, %c0_22] : memref<1x256xf32, #tpu.memory_space<vmem>>, vector<1x256xf32>
      tpu.vector_store %arg6[%c0_21, %c0_22], %48 {strides = array<i32>} : memref<1x256xf32, #tpu.memory_space<vmem>>, vector<1x256xf32>,
    } else {
    }
    %c0 = arith.constant 0 : index
    %c0_2 = arith.constant 0 : index
    %c0_3 = arith.constant 0 : index
    %5 = vector.load %arg2[%c0, %c0_2, %c0_3] : memref<1x4x256xf32, #tpu.memory_space<vmem>>, vector<1x4x256xf32>
    %6 = vector.shape_cast %5 : vector<1x4x256xf32> to vector<4x256xf32>
    %c0_4 = arith.constant 0 : index
    %c0_5 = arith.constant 0 : index
    %c0_6 = arith.constant 0 : index
    %7 = vector.load %arg3[%c0_4, %c0_5, %c0_6] : memref<1x1x256xi32, #tpu.memory_space<vmem>>, vector<1x1x256xi32>
    %8 = vector.shape_cast %7 : vector<1x1x256xi32> to vector<1x256xi32>
    %cst = arith.constant dense<0xFF800000> : vector<256xf32>
    %9 = vector.multi_reduction <maximumf>, %6, %cst [0] : vector<4x256xf32> to vector<256xf32>
    %10 = vector.shape_cast %9 : vector<256xf32> to vector<1x256xf32>
    %11 = vector.broadcast %10 : vector<1x256xf32> to vector<4x256xf32>
    %12 = arith.subf %6, %11 : vector<4x256xf32>
    %13 = math.exp %12 : vector<4x256xf32>
    %cst_7 = arith.constant dense<0.000000e+00> : vector<256xf32>
    %14 = vector.multi_reduction <add>, %13, %cst_7 [0] : vector<4x256xf32> to vector<256xf32>
    %15 = vector.shape_cast %14 : vector<256xf32> to vector<1x256xf32>
    %16 = math.log %15 : vector<1x256xf32>
    %17 = vector.broadcast %16 : vector<1x256xf32> to vector<4x256xf32>
    %18 = arith.subf %12, %17 : vector<4x256xf32>
    %19 = tpu.iota {dimensions = array<i32: 0>} : vector<4x256xi32>
    %20 = vector.broadcast %8 : vector<1x256xi32> to vector<4x256xi32>
    %21 = arith.cmpi eq, %19, %20 : vector<4x256xi32>
    %22 = arith.extui %21 : vector<4x256xi1> to vector<4x256xi32>
    %23 = arith.sitofp %22 : vector<4x256xi32> to vector<4x256xf32>
    %24 = arith.mulf %18, %23 : vector<4x256xf32>
    %cst_8 = arith.constant dense<0.000000e+00> : vector<256xf32>
    %25 = vector.multi_reduction <add>, %24, %cst_8 [0] : vector<4x256xf32> to vector<256xf32>
    %26 = vector.shape_cast %25 : vector<256xf32> to vector<1x256xf32>
    %27 = math.exp %26 : vector<1x256xf32>
    %c0_9 = arith.constant 0 : index
    %c0_10 = arith.constant 0 : index
    %28 = vector.load %arg4[%c0_9, %c0_10] : memref<4x1xf32, #tpu.memory_space<vmem>>, vector<4x1xf32>
    %29 = vector.broadcast %28 : vector<4x1xf32> to vector<4x256xf32>
    %30 = arith.mulf %29, %23 : vector<4x256xf32>
    %cst_11 = arith.constant dense<0.000000e+00> : vector<256xf32>
    %31 = vector.multi_reduction <add>, %30, %cst_11 [0] : vector<4x256xf32> to vector<256xf32>
    %32 = vector.shape_cast %31 : vector<256xf32> to vector<1x256xf32>
    %33 = arith.mulf %26, %32 : vector<1x256xf32>
    %cst_12 = arith.constant 1.000000e+00 : f32
    %34 = vector.broadcast %cst_12 : f32 to vector<1x256xf32>
    %35 = arith.subf %34, %27 : vector<1x256xf32>
    %36 = arith.mulf %35, %35 : vector<1x256xf32>
    %cst_13 = arith.constant 0.000000e+00 : f32
    %37 = vector.broadcast %cst_13 : f32 to vector<1x256xf32>
    %38 = arith.subf %37, %36 : vector<1x256xf32>
    %39 = arith.mulf %38, %33 : vector<1x256xf32>
    %c0_14 = arith.constant 0 : index
    %c0_15 = arith.constant 0 : index
    %40 = vector.load %arg6[%c0_14, %c0_15] : memref<1x256xf32, #tpu.memory_space<vmem>>, vector<1x256xf32>
    %41 = arith.addf %40, %39 : vector<1x256xf32>
    %c0_16 = arith.constant 0 : index
    %c0_17 = arith.constant 0 : index
    %42 = vector.load %arg6[%c0_16, %c0_17] : memref<1x256xf32, #tpu.memory_space<vmem>>, vector<1x256xf32>
    tpu.vector_store %arg6[%c0_16, %c0_17], %41 {strides = array<i32>} : memref<1x256xf32, #tpu.memory_space<vmem>>, vector<1x256xf32>,
    %c1_i32 = arith.constant 1 : i32
    %43 = arith.cmpi eq, %arg0, %c1_i32 : i32
    %c0_i32_18 = arith.constant 0 : i32
    %44 = arith.cmpi eq, %arg1, %c0_i32_18 : i32
    %45 = arith.andi %43, %44 : i1
    %46 = arith.extui %45 : i1 to i32
    %c0_i32_19 = arith.constant 0 : i32
    %47 = arith.cmpi ne, %46, %c0_i32_19 : i32
    scf.if %47 {
      %c0_20 = arith.constant 0 : index
      %c0_21 = arith.constant 0 : index
      %48 = vector.load %arg6[%c0_20, %c0_21] : memref<1x256xf32, #tpu.memory_space<vmem>>, vector<1x256xf32>
      %49 = vector.shape_cast %48 : vector<1x256xf32> to vector<1x1x256xf32>
      %cst_22 = arith.constant dense<0.000000e+00> : vector<1xf32>
      %50 = vector.multi_reduction <add>, %49, %cst_22 [1, 2] : vector<1x1x256xf32> to vector<1xf32>
      %51 = vector.shape_cast %50 : vector<1xf32> to vector<1x1x1xf32>
      %52 = vector.extract %51[0, 0, 0] : f32 from vector<1x1x1xf32>
      %53 = vector.broadcast %52 : f32 to vector<1x1xf32>
      %cst_23 = arith.constant 5.120000e+02 : f32
      %54 = vector.broadcast %cst_23 : f32 to vector<1x1xf32>
      %55 = arith.divf %53, %54 : vector<1x1xf32>
      %c0_24 = arith.constant 0 : index
      %c0_25 = arith.constant 0 : index
      %56 = vector.load %arg5[%c0_24, %c0_25] : memref<1x1xf32, #tpu.memory_space<vmem>>, vector<1x1xf32>
      tpu.vector_store %arg5[%c0_24, %c0_25], %55 {strides = array<i32>} : memref<1x1xf32, #tpu.memory_space<vmem>>, vector<1x1xf32>,
    } else {
    }
    return
  }
  func.func @transform_0(%arg0: i32, %arg1: i32) -> (i32, i32, i32) {
    %c0_i32 = arith.constant 0 : i32
    %c0_i32_0 = arith.constant 0 : i32
    return %arg0, %c0_i32, %arg1 : i32, i32, i32
  }
  func.func @transform_1(%arg0: i32, %arg1: i32) -> (i32, i32, i32) {
    %c0_i32 = arith.constant 0 : i32
    %c0_i32_0 = arith.constant 0 : i32
    return %arg0, %c0_i32, %arg1 : i32, i32, i32
  }
  func.func @transform_2(%arg0: i32, %arg1: i32) -> (i32, i32) {
    %c0_i32 = arith.constant 0 : i32
    %c0_i32_0 = arith.constant 0 : i32
    %c0_i32_1 = arith.constant 0 : i32
    return %c0_i32, %c0_i32_0 : i32, i32
  }
  func.func @transform_3(%arg0: i32, %arg1: i32) -> (i32, i32) {
    %c0_i32 = arith.constant 0 : i32
    %c0_i32_0 = arith.constant 0 : i32
    %c0_i32_1 = arith.constant 0 : i32
    return %c0_i32, %c0_i32_0 : i32, i32
  }
}

</mosaic_0001>

<llo_original>
// kernel: tpu_custom_call.1
$region0: #{tpu_custom_call.1}
  #allocation0 [shape = 'u32[]', space=smem, size = 0x4, offset = 0x4, fixed_abs, tag = 'smem constant byte address 0x4 - core index']
  #allocation1 [shape = 'u32[72,128]{1,0:T(1,128)}', space=vmem, size = 0x9000, scoped, tag = 'internal scratch']
  #allocation2 [shape = 'f32[1,256]{1,0:T(1,128)}', space=vmem, size = 0x400, scoped, tag = 'scratch operand']
  %s0 = inlined_call_operand.hbm [shape: f32[2,4,256], index: 0, kind: input, shape index: {}]
  %s1 = inlined_call_operand.vmem [shape: s32[2,1,256], index: 1, kind: input, shape index: {}]
  %s2 = inlined_call_operand.vmem [shape: f32[4,1], index: 2, kind: input, shape index: {}]
  %s3 = inlined_call_operand.hbm [shape: f32[1,1], index: 3, kind: output, shape index: {}]
  %s4 = sld [smem:[#allocation0]]
  $region57: #{tpu_custom_call.1} parent=0
    _
  %s6 = ssub.s32 1, %s4
  %s7 = scalar_select 0, %s6, %s4
  $region1: #{tpu_custom_call.1} parent=0
    #allocation3 [shape = 'u8[8192]{0}', space=vmem, size = 0x2000, scoped, tag = 'input window, operand 0']
    #allocation4 [shape = 's32[2]{0}', space=sflag, size = 0x8, scoped, tag = 'scoped memory for tpu_custom_call.1']
    #allocation5 [shape = 's32[2]{0}', space=sflag, size = 0x8, scoped, tag = 'scoped memory for tpu_custom_call.1']
    #allocation6 [shape = 'u8[512]{0}', space=vmem, size = 0x400, scoped, tag = 'output window, operand 0, single buffered']
    %8 = vsyncpa [#allocation4], 0
    %s9 = scalar_lea.sflag [#allocation4], 1
    %10 = vsyncpa %s9, 0
    %11 = vsyncpa [#allocation5], 0
    loop: start=0, step=1, limit=4
    $region2: #{tpu_custom_call.1} parent=1 // loop_pre_header
      _
    $region3: #{tpu_custom_call.1} parent=1 // loop_header
      %s13 = sphi 0, %s17
      %p14 = scmp.ge.s32.totalorder %s13, 4
      %s20 = sphi 0, %s32
      %s21 = sphi 0, %s28
      %s22 = sphi 0, %s20
      %s23 = sphi 0, %s21
      %s24 = sphi 0, %s22
      %s25 = sphi 0, %s23
      %s37 = sphi 0, %s39
      %s40 = sphi 0, %s37
      %s41 = sphi 0, %s40
      %s57 = sphi 0, %s41
      %s65 = sphi 0, %s67
      %s68 = sphi 0, %s65
      %s69 = sphi 0, %s68
      %s85 = sphi 0, %s69
      %s89 = sphi 0, %s89
      %s91 = sphi 0, %s89
      %s92 = sphi 0, %s91
      %s106 = sphi 0, %s92
      %s110 = sphi 0, %s110
      %s112 = sphi 0, %s110
      %s113 = sphi 0, %s112
      %s127 = sphi 0, %s113
    $region4: #{tpu_custom_call.1} parent=1 // loop_header_branch
      %16 = sbr.rel (%p14) target = $region8
    $region5: #{tpu_custom_call.1} parent=1 // loop_body
      %s18 = ssub.s32 %s13, 1
      %s19 = ssub.s32 %s13, 2
      %s26 = sadd.s32 1, %s21
      %p27 = scmp.ge.s32.totalorder %s26, 1
      %s28 = scalar_select %p27, 0, %s26
      %s29 = sadd.s32 1, %s20
      %s30 = scalar_select %p27, %s29, %s20
      %p31 = scmp.ge.s32.totalorder %s30, 2
      %s32 = scalar_select %p31, 0, %s30
      %s33 = ssub.s32 %s20, %s32
      %s34 = ssub.s32 %s21, %s28
      %s35 = sor.u32 %s33, %s34
      %p36 = scmp.eq.s32.totalorder %s35, 0
      %s38 = sadd.s32 %s37, 1
      %s39 = scalar_select %p36, %s37, %s38
      %p42 = pneg %p36
      %p43 = scmp.eq.s32.totalorder %s13, 1
      %p44 = por %p42, %p43
      %p45 = scmp.ne.s32.totalorder %s37, %s40
      %p46 = scmp.eq.s32.totalorder %s13, 0
      %p47 = por %p45, %p46
      %p48 = scmp.ne.s32.totalorder %s37, %s40
      %p49 = scmp.eq.s32.totalorder %s18, 1
      %p50 = por %p48, %p49
      %p51 = scmp.ne.s32.totalorder %s40, %s41
      %p52 = scmp.eq.s32.totalorder %s18, 0
      %p53 = por %p51, %p52
      %p54 = scmp.ne.s32.totalorder %s40, %s41
      %p55 = scmp.eq.s32.totalorder %s19, 1
      %p56 = por %p54, %p55
      %p58 = scmp.ne.s32.totalorder %s41, %s57
      %p59 = scmp.eq.s32.totalorder %s19, 0
      %p60 = por %p58, %p59
      %s61 = ssub.s32 %s20, %s32
      %s62 = ssub.s32 %s21, %s28
      %s63 = sor.u32 %s61, %s62
      %p64 = scmp.eq.s32.totalorder %s63, 0
      %s66 = sadd.s32 %s65, 1
      %s67 = scalar_select %p64, %s65, %s66
      %p70 = pneg %p64
      %p71 = scmp.eq.s32.totalorder %s13, 1
      %p72 = por %p70, %p71
      %p73 = scmp.ne.s32.totalorder %s65, %s68
      %p74 = scmp.eq.s32.totalorder %s13, 0
      %p75 = por %p73, %p74
      %p76 = scmp.ne.s32.totalorder %s65, %s68
      %p77 = scmp.eq.s32.totalorder %s18, 1
      %p78 = por %p76, %p77
      %p79 = scmp.ne.s32.totalorder %s68, %s69
      %p80 = scmp.eq.s32.totalorder %s18, 0
      %p81 = por %p79, %p80
      %p82 = scmp.ne.s32.totalorder %s68, %s69
      %p83 = scmp.eq.s32.totalorder %s19, 1
      %p84 = por %p82, %p83
      %p86 = scmp.ne.s32.totalorder %s69, %s85
      %p87 = scmp.eq.s32.totalorder %s19, 0
      %p88 = por %p86, %p87
      %s90 = sadd.s32 %s89, 1
      %p93 = scmp.eq.s32.totalorder %s13, 1
      %p94 = scmp.ne.s32.totalorder %s89, %s91
      %p95 = scmp.eq.s32.totalorder %s13, 0
      %p96 = por %p94, %p95
      %p97 = scmp.ne.s32.totalorder %s89, %s91
      %p98 = scmp.eq.s32.totalorder %s18, 1
      %p99 = por %p97, %p98
      %p100 = scmp.ne.s32.totalorder %s91, %s92
      %p101 = scmp.eq.s32.totalorder %s18, 0
      %p102 = por %p100, %p101
      %p103 = scmp.ne.s32.totalorder %s91, %s92
      %p104 = scmp.eq.s32.totalorder %s19, 1
      %p105 = por %p103, %p104
      %p107 = scmp.ne.s32.totalorder %s92, %s106
      %p108 = scmp.eq.s32.totalorder %s19, 0
      %p109 = por %p107, %p108
      %s111 = sadd.s32 %s110, 1
      %p114 = scmp.eq.s32.totalorder %s13, 1
      %p115 = scmp.ne.s32.totalorder %s110, %s112
      %p116 = scmp.eq.s32.totalorder %s13, 0
      %p117 = por %p115, %p116
      %p118 = scmp.ne.s32.totalorder %s110, %s112
      %p119 = scmp.eq.s32.totalorder %s18, 1
      %p120 = por %p118, %p119
      %p121 = scmp.ne.s32.totalorder %s112, %s113
      %p122 = scmp.eq.s32.totalorder %s18, 0
      %p123 = por %p121, %p122
      %p124 = scmp.ne.s32.totalorder %s112, %s113
      %p125 = scmp.eq.s32.totalorder %s19, 1
      %p126 = por %p124, %p125
      %p128 = scmp.ne.s32.totalorder %s113, %s127
      %p129 = scmp.eq.s32.totalorder %s19, 0
      %p130 = por %p128, %p129
      %p131 = scmp.le.s32.totalorder 1, %s13
      %p132 = scmp.lt.s32.totalorder %s13, 3
      %p133 = pnand %p131, %p132
      %p134 = pneg %p133
      // Predicated region
      $region9: #{tpu_custom_call.1} parent=5 // pred_check
        _
      $region10: #{tpu_custom_call.1} parent=5 // pred_check_branch
        %136 = sbr.rel (%p133) target = $region12
      $region11: #{tpu_custom_call.1} parent=5 // pred_region
        %s137 = ssub.s32 %s13, 1
        // Predicated region
        $region13: #{tpu_custom_call.1} parent=11 // pred_check
          %p138 = pneg %p102
        $region14: #{tpu_custom_call.1} parent=11 // pred_check_branch
          %140 = sbr.rel (%p138) target = $region16
        $region15: #{tpu_custom_call.1} parent=11 // pred_region
          _
        $region16: #{tpu_custom_call.1} parent=11 // pred_fallthru
          _
      $region12: #{tpu_custom_call.1} parent=5 // pred_fallthru
        _
      %p141 = scmp.lt.s32.totalorder %s13, 2
      // Predicated region
      $region17: #{tpu_custom_call.1} parent=5 // pred_check
        %p142 = pneg %p141
      $region18: #{tpu_custom_call.1} parent=5 // pred_check_branch
        %144 = sbr.rel (%p142) target = $region20
      $region19: #{tpu_custom_call.1} parent=5 // pred_region
        // Predicated region
        $region21: #{tpu_custom_call.1} parent=19 // pred_check
          %p145 = pneg %p47
        $region22: #{tpu_custom_call.1} parent=19 // pred_check_branch
          %147 = sbr.rel (%p145) target = $region24
        $region23: #{tpu_custom_call.1} parent=19 // pred_region
          %s148 = sand.u32 %s37, 1
          %s149 = scalar_lea.sflag [#allocation4], %s148
          %s150 = sand.u32 %s37, 1
          %s151 = smul.addr %s150, 8
          %s152 = scalar_lea.vmem [#allocation3], %s151
          %s153 = smul.u32 2, %s21
          %155 = vsyncadd %s149, 0
          %s156 = smul.addr %s20, 2
          %s157 = sadd.s32 %s153, %s156
          %s158 = smul.addr %s157, 4
          %s159 = scalar_lea.hbm %s0, %s158
          %s161 = sshll.u32 %s159, 4
          %s162 = int_to_ptr.hbm [resolvable:$true] %s161
          %s163 = sshll.u32 %s152, 4
          %s164 = int_to_ptr.vmem [resolvable:$true] %s163
          %166 = dma.hbm_to_vmem [thread:$0]  %s162, 128, %s164, %s149
        $region24: #{tpu_custom_call.1} parent=19 // pred_fallthru
          _
        // Predicated region
        $region25: #{tpu_custom_call.1} parent=19 // pred_check
          %p167 = pneg %p75
        $region26: #{tpu_custom_call.1} parent=19 // pred_check_branch
          %169 = sbr.rel (%p167) target = $region28
        $region27: #{tpu_custom_call.1} parent=19 // pred_region
          %s170 = smul.u32 2, %s21
          %p171 = scmp.lt.s32.totalorder %s20, 1
          %s172 = scalar_select %p171, %s20, 1
          %p173 = scmp.lt.s32.totalorder %s170, 1
          %s174 = scalar_select %p173, %s170, 1
          %s175 = smul.addr %s172, 2
          %s176 = sadd.s32 %s174, %s175
          %s177 = scalar_lea.vmem %s1, %s176
          %s178 = smul.u32 2, %s21
        $region28: #{tpu_custom_call.1} parent=19 // pred_fallthru
          _
      $region20: #{tpu_custom_call.1} parent=5 // pred_fallthru
        _
      %p179 = scmp.le.s32.totalorder 1, %s13
      %p180 = scmp.lt.s32.totalorder %s13, 3
      %p181 = pnand %p179, %p180
      %p182 = pneg %p181
      // Predicated region
      $region29: #{tpu_custom_call.1} parent=5 // pred_check
        _
      $region30: #{tpu_custom_call.1} parent=5 // pred_check_branch
        %184 = sbr.rel (%p181) target = $region32
      $region31: #{tpu_custom_call.1} parent=5 // pred_region
        %s185 = ssub.s32 %s13, 1
        %s186 = sand.u32 %s40, 1
        %s187 = scalar_lea.sflag [#allocation4], %s186
        %s188 = sand.u32 %s40, 1
        %s189 = smul.addr %s188, 8
        %s190 = scalar_lea.vmem [#allocation3], %s189
        // Predicated region
        $region33: #{tpu_custom_call.1} parent=31 // pred_check
          %p191 = pneg %p53
        $region34: #{tpu_custom_call.1} parent=31 // pred_check_branch
          %193 = sbr.rel (%p191) target = $region36
        $region35: #{tpu_custom_call.1} parent=31 // pred_region
          %195 = dma.done %s187, 128
        $region36: #{tpu_custom_call.1} parent=31 // pred_fallthru
          _
        %s196 = sand.u32 %s40, 1
        %s197 = scalar_lea.sflag [#allocation4], %s196
        %s198 = sand.u32 %s40, 1
        %s199 = smul.addr %s198, 8
        %s200 = scalar_lea.vmem [#allocation3], %s199
        %p201 = pneg %p53
        %p202 = pneg %p50
        %s203 = smul.u32 2, %s23
        %p204 = scmp.lt.s32.totalorder %s22, 1
        %s205 = scalar_select %p204, %s22, 1
        %p206 = scmp.lt.s32.totalorder %s203, 1
        %s207 = scalar_select %p206, %s203, 1
        %s208 = smul.addr %s205, 2
        %s209 = sadd.s32 %s207, %s208
        %s210 = scalar_lea.vmem %s1, %s209
        %p211 = pneg %p81
        %p212 = pneg %p78
        %p213 = pneg %p102
        %p214 = pneg %p99
        %p215 = pneg %p123
        %p216 = pneg %p120
        %s217 = smul.u32 2, %s23
        %s218 = smul.u32 2, %s23
        %p219 = scmp.lt.s32.totalorder %s22, 1
        %s220 = scalar_select %p219, %s22, 1
        %p221 = scmp.lt.s32.totalorder %s218, 1
        %s222 = scalar_select %p221, %s218, 1
        %s223 = smul.addr %s220, 2
        %s224 = sadd.s32 %s222, %s223
        %s225 = scalar_lea.vmem %s1, %s224
        %s226 = smul.u32 2, %s23
        %p227 = scmp.eq.s32.totalorder %s22, 0
        %p228 = scmp.eq.s32.totalorder %s23, 0
        %p229 = pnand %p227, %p228
        %p230 = pneg %p229
        // Predicated region
        $region37: #{tpu_custom_call.1} parent=31 // pred_check
          _
        $region38: #{tpu_custom_call.1} parent=31 // pred_check_branch
          %232 = sbr.rel (%p229) target = $region40
        $region39: #{tpu_custom_call.1} parent=31 // pred_region
          %v233 = vlaneseq
          %vm234 = vcmp.ge.s32.totalorder %v233, 0
          %vm235 = vcmp.lt.s32.totalorder %v233, 256
          %vm236 = vmand %vm234, %vm235
          %237 = vst.msk [vmem:[#allocation2] sm:$0x3] %vm236, 0.0
        $region40: #{tpu_custom_call.1} parent=31 // pred_fallthru
          _
        %v238 = vld [vmem:[%s190] sm:$0xff]
        %v239 = vld [vmem:[%s225] sm:$0x3]
        %241 = vst [vmem:[#allocation1] ss:$2 sm:$0xff] %v238
        %v242 = vld.sshfl [vmem:[#allocation1] sm:$0xff pattern:$0x75316420]
        %v243 = vld.sshfl [vmem:[#allocation1 + $0x8] sm:$0xff pattern:$0x75316420]
        %vm246 = vcmask 1043456
        %v247 = vsel %vm246, %v242, -inf
        %v248 = vrot.slane %v247, 4
        %v249 = vmax.f32 %v247, %v248
        %v250 = vrot.slane %v249, 2
        %v251 = vmax.f32 %v249, %v250
        %v252 = vrot.slane %v251, 1
        %v253 = vmax.f32 %v251, %v252
        %v254 = vsel %vm246, %v243, -inf
        %v255 = vrot.slane %v254, 4
        %v256 = vmax.f32 %v254, %v255
        %v257 = vrot.slane %v256, 2
        %v258 = vmax.f32 %v256, %v257
        %v259 = vrot.slane %v258, 1
        %v260 = vmax.f32 %v258, %v259
        %v263 = vrot.slane %v260, 4
        %v264 = vsel %vm246, %v253, %v263
        %v266 = vsub.f32 %v238, %v264
        %v267 = vmul.f32 %v266, 1.442695
        %v268 = vpow.pop %v267
        %270 = vst [vmem:[#allocation1] ss:$2 sm:$0xff] %v268
        %v271 = vld.sshfl [vmem:[#allocation1] sm:$0xff pattern:$0x75316420]
        %v272 = vld.sshfl [vmem:[#allocation1 + $0x8] sm:$0xff pattern:$0x75316420]
        %v275 = vsel %vm246, %v271, 0.0
        %v276 = vrot.slane %v275, 4
        %v277 = vadd.f32 %v275, %v276
        %v278 = vrot.slane %v277, 2
        %v279 = vadd.f32 %v277, %v278
        %v280 = vrot.slane %v279, 1
        %v281 = vadd.f32 %v279, %v280
        %v282 = vsel %vm246, %v272, 0.0
        %v283 = vrot.slane %v282, 4
        %v284 = vadd.f32 %v282, %v283
        %v285 = vrot.slane %v284, 2
        %v286 = vadd.f32 %v284, %v285
        %v287 = vrot.slane %v286, 1
        %v288 = vadd.f32 %v286, %v287
        %v289 = vlog2.pop %v281
        %v290 = vmul.f32 %v289, 0.6931472
        %v291 = vlog2.pop %v288
        %v292 = vmul.f32 %v291, 0.6931472
        %v295 = vrot.slane %v292, 4
        %v296 = vsel %vm246, %v290, %v295
        %v298 = vsub.f32 %v266, %v296
        %v299 = vlaneseq
        %v300 = vshrl.u32 %v299, 7
        %v301 = vperm.slane %v239, 0
        %v302 = vperm.slane %v239, 1
        %vm303 = vcmp.eq.s32.totalorder %v300, %v301
        %vm304 = vcmp.eq.s32.totalorder %v300, %v302
        %v305 = vsel %vm303, 1, 0
        %v306 = vsel %vm304, 1, 0
        %v307 = vcvt.s32.f32 %v305
        %v308 = vcvt.s32.f32 %v306
        %v311 = vrot.slane %v308, 4
        %v312 = vsel %vm246, %v307, %v311
        %v314 = vmul.f32 %v298, %v312
        %316 = vst [vmem:[#allocation1] ss:$2 sm:$0xff] %v314
        %v317 = vld.sshfl [vmem:[#allocation1] sm:$0xff pattern:$0x75316420]
        %v318 = vld.sshfl [vmem:[#allocation1 + $0x8] sm:$0xff pattern:$0x75316420]
        %v321 = vsel %vm246, %v317, 0.0
        %v322 = vrot.slane %v321, 4
        %v323 = vadd.f32 %v321, %v322
        %v324 = vrot.slane %v323, 2
        %v325 = vadd.f32 %v323, %v324
        %v326 = vrot.slane %v325, 1
        %v327 = vadd.f32 %v325, %v326
        %v328 = vsel %vm246, %v318, 0.0
        %v329 = vrot.slane %v328, 4
        %v330 = vadd.f32 %v328, %v329
        %v331 = vrot.slane %v330, 2
        %v332 = vadd.f32 %v330, %v331
        %v333 = vrot.slane %v332, 1
        %v334 = vadd.f32 %v332, %v333
        %v335 = vmul.f32 %v327, 1.442695
        %v336 = vpow.pop %v335
        %v337 = vmul.f32 %v334, 1.442695
        %v338 = vpow.pop %v337
        %v339 = vld [vmem:[%s2] sm:$0xf]
        %341 = vset.pattern.permute.xlu0 0
        %342 = vperm.xlu0 %341, %v339
        %v343 = vpop.permute.xlu0 %342
        %v345 = vmul.f32 %v343, %v307
        %v346 = vmul.f32 %v343, %v308
        %v347 = vsel %vm246, %v345, 0.0
        %v348 = vrot.slane %v347, 4
        %v349 = vadd.f32 %v347, %v348
        %v350 = vrot.slane %v349, 2
        %v351 = vadd.f32 %v349, %v350
        %v352 = vrot.slane %v351, 1
        %v353 = vadd.f32 %v351, %v352
        %v354 = vsel %vm246, %v346, 0.0
        %v355 = vrot.slane %v354, 4
        %v356 = vadd.f32 %v354, %v355
        %v357 = vrot.slane %v356, 2
        %v358 = vadd.f32 %v356, %v357
        %v359 = vrot.slane %v358, 1
        %v360 = vadd.f32 %v358, %v359
        %v361 = vmul.f32 %v327, %v353
        %v362 = vmul.f32 %v334, %v360
        %v363 = vsub.f32 1.0, %v336
        %v364 = vsub.f32 1.0, %v338
        %v365 = vmul.f32 %v363, %v363
        %v366 = vmul.f32 %v364, %v364
        %v367 = vsub.f32 0.0, %v365
        %v368 = vsub.f32 0.0, %v366
        %v369 = vmul.f32 %v367, %v361
        %v370 = vmul.f32 %v368, %v362
        %v371 = vld [vmem:[#allocation2] sm:$0x3]
        %v374 = vrot.slane %v370, 7
        %vm375 = vcmask 1040384
        %v376 = vsel %vm375, %v369, %v374
        %v378 = vadd.f32 %v371, %v376
        %v379 = vlaneseq
        %vm380 = vcmp.ge.s32.totalorder %v379, 0
        %vm381 = vcmp.lt.s32.totalorder %v379, 256
        %vm382 = vmand %vm380, %vm381
        %383 = vst.msk [vmem:[#allocation2] sm:$0x3] %vm382, %v378
        %p384 = scmp.eq.s32.totalorder %s22, 1
        %p385 = pnand %p384, %p228
        %p386 = pneg %p385
        // Predicated region
        $region41: #{tpu_custom_call.1} parent=31 // pred_check
          _
        $region42: #{tpu_custom_call.1} parent=31 // pred_check_branch
          %388 = sbr.rel (%p385) target = $region44
        $region43: #{tpu_custom_call.1} parent=31 // pred_region
          %v389 = vld [vmem:[#allocation2] sm:$0x3]
          %v391 = vperm.slane %v389, 0
          %v392 = vperm.slane %v389, 1
          %v395 = vsel %vm375, %v391, 0.0
          %v396 = vsel %vm375, %v392, 0.0
          %v397 = vadd.f32 %v395, %v396
          %398 = vadd.xlane.f32.xlu0 %v397
          %v399 = vpop.xlane.xlu0 %398
          %v400 = vrot.slane %v399, 4
          %v401 = vadd.f32 %v399, %v400
          %v402 = vrot.slane %v401, 2
          %v403 = vadd.f32 %v401, %v402
          %v404 = vrot.slane %v403, 1
          %v405 = vadd.f32 %v403, %v404
          %s406 = vtos %v405
          %v407 = vstv %s406
          %v408 = vrcp.pop 512.0
          %v409 = vmul.f32 512.0, %v408
          %v410 = vsub.f32 1.0, %v409
          %v411 = vmul.f32 %v408, %v410
          %v412 = vadd.f32 %v408, %v411
          %vm413 = vweird.f32 %v408
          %v414 = vsel %vm413, %v408, %v412
          %v415 = vmul.f32 %v407, %v414
          %vm416 = vcmask 0
          %417 = vst.msk [vmem:[#allocation6] sm:$0x1] %vm416, %v415
        $region44: #{tpu_custom_call.1} parent=31 // pred_fallthru
          _
        // Predicated region
        $region45: #{tpu_custom_call.1} parent=31 // pred_check
          %p418 = pneg %p120
        $region46: #{tpu_custom_call.1} parent=31 // pred_check_branch
          %420 = sbr.rel (%p418) target = $region48
        $region47: #{tpu_custom_call.1} parent=31 // pred_region
          %422 = vsyncadd [#allocation5], 0
          %s424 = sshll.u32 [#allocation6], 4
          %s425 = int_to_ptr.vmem [resolvable:$true] %s424
          %s426 = sshll.u32 %s3, 4
          %s427 = int_to_ptr.hbm [resolvable:$true] %s426
          %429 = dma.vmem_to_hbm [thread:$0]  %s425, 16, %s427, [#allocation5]
        $region48: #{tpu_custom_call.1} parent=31 // pred_fallthru
          _
        // Predicated region
        $region49: #{tpu_custom_call.1} parent=31 // pred_check
          %p430 = pneg %p120
        $region50: #{tpu_custom_call.1} parent=31 // pred_check_branch
          %432 = sbr.rel (%p430) target = $region52
        $region51: #{tpu_custom_call.1} parent=31 // pred_region
          %434 = dma.done [#allocation5], 16
        $region52: #{tpu_custom_call.1} parent=31 // pred_fallthru
          _
      $region32: #{tpu_custom_call.1} parent=5 // pred_fallthru
        _
      %p435 = scmp.le.s32.totalorder 2, %s13
      // Predicated region
      $region53: #{tpu_custom_call.1} parent=5 // pred_check
        %p436 = pneg %p435
      $region54: #{tpu_custom_call.1} parent=5 // pred_check_branch
        %438 = sbr.rel (%p436) target = $region56
      $region55: #{tpu_custom_call.1} parent=5 // pred_region
        %s439 = ssub.s32 %s13, 2
      $region56: #{tpu_custom_call.1} parent=5 // pred_fallthru
        _
    $region6: #{tpu_custom_call.1} parent=1 // loop_footer
      %s17 = sadd.s32 1, %s13
    $region7: #{tpu_custom_call.1} parent=1 // loop_footer_branch
      %12 = sbr.rel target = $region3
    $region8: #{tpu_custom_call.1} parent=1 // loop_exit
      _
    %440 = vsyncpa [#allocation4], 1
    %s441 = scalar_lea.sflag [#allocation4], 1
    %442 = vsyncpa %s441, 1
    %443 = vsyncpa [#allocation5], 1
    %s444 = scalar_lea.sflag [#allocation5], 1
    %445 = vsyncpa %s444, 1

</llo_original>
